<compile_context>
chip_gen: v7x
topology: tpu7x:2x2x1
jax: 0.10.0
libtpu: 0.0.40
codegen_flags: <defaults>
</compile_context>

<pallas_src>
import numpy as np
import jax
import jax.numpy as jnp
from jax.experimental import pallas as pl
from jax.experimental.pallas import tpu as pltpu


def _round_up(x, m):
    return ((x + m - 1) // m) * m


# ----------------------------------------------------------------------------
# Deterministic construction of the (sparse) linear-kernel paths.
# Mirrors e3nn's kernel_linear: for every (out irrep block, in irrep block) pair
# with l_in == l_out and p_out in {0, p_in}, each (mul_out, mul_in) combination
# is one "path" whose coupling is the identity over m, scaled by 1/sqrt(2l+1).
# ----------------------------------------------------------------------------
def _linear_paths(Rs_in, Rs_out):
    dim_in = sum(mul * (2 * l + 1) for mul, l, _ in Rs_in)
    dim_out = sum(mul * (2 * l + 1) for mul, l, _ in Rs_out)

    entries = []  # (i_out, j_in, k_path, value)
    n_path = 0
    out_off = 0
    for mul_out, l_out, p_out in Rs_out:
        dim_m_out = 2 * l_out + 1
        in_off = 0
        for mul_in, l_in, p_in in Rs_in:
            dim_m_in = 2 * l_in + 1
            if l_in == l_out and p_out in (0, p_in):
                norm = 1.0 / np.sqrt(dim_m_in)
                for u in range(mul_out):
                    for v in range(mul_in):
                        k = n_path
                        n_path += 1
                        for m in range(dim_m_in):
                            i = out_off + u * dim_m_out + m
                            j = in_off + v * dim_m_in + m
                            entries.append((i, j, k, norm))
            in_off += mul_in * dim_m_in
        out_off += mul_out * dim_m_out
    return dim_out, dim_in, n_path, entries


def _reference_forward(Rs_in, Rs_out, weight_np):
    """Pure numpy reference for einsum('ijk,k', Q, weight)."""
    dim_out, dim_in, _, entries = _linear_paths(Rs_in, Rs_out)
    ref = np.zeros((dim_out, dim_in), np.float64)
    w = np.asarray(weight_np, np.float64)
    for i, j, k, v in entries:
        ref[i, j] += float(v) * w[k]
    return ref


# ----------------------------------------------------------------------------
# Build Q once in the kernel-friendly layout: q_flat[k, i*dim_in + j] = Q[i, j, k].
# Also chooses all tile sizes (byte-based) and returns them in `meta`.
# ----------------------------------------------------------------------------
def build_linear_q_flat(Rs_in, Rs_out, *, q_dtype=jnp.float32,
                        target_block_bytes=4 << 20, vmem_budget_bytes=24 << 20):
    dim_out, dim_in, n_path, entries = _linear_paths(Rs_in, Rs_out)
    n = dim_out * dim_in

    q_dt = jnp.dtype(q_dtype)
    q_bytes = q_dt.itemsize
    # Group of sublane rows processed per FMA step: keep slices tile-aligned
    # (f32 tiles are (8,128); bf16 packs 2 rows/sublane -> (16,128) tiles).
    group = 16 if q_bytes == 2 else 8
    k_pad = max(group, _round_up(max(n_path, 1), group))

    # Lane sub-tile: keep the live (group, sub_tn) f32 accumulator at <= 16 vregs.
    sub_tn = (64 << 10) // (group * 4)          # 2048 (f32) / 1024 (bf16)
    n128 = _round_up(max(n, 1), 128)
    sub_tn = min(sub_tn, n128)
    # Keep even a single double-buffered (k_pad, sub_tn) Q block inside VMEM.
    max_sub = (vmem_budget_bytes // (2 * k_pad * q_bytes)) // 128 * 128
    if max_sub >= 128:
        sub_tn = min(sub_tn, max_sub)
    sub_tn = max(128, sub_tn)

    n_pad = _round_up(max(n, 1), sub_tn)

    # Lane tile per grid step: multiple of sub_tn sized so the Q block is
    # ~target_block_bytes (amortizes the ~0.35 us per-grid-step overhead).
    blk = max(1, target_block_bytes // (k_pad * q_bytes * sub_tn))
    tn = min(blk * sub_tn, n_pad)
    # Keep at least 2 grid steps when possible so v7x's 2 TCs both get work.
    if tn >= n_pad and n_pad >= 2 * sub_tn:
        tn = (n_pad // (2 * sub_tn)) * sub_tn
    n_pad = _round_up(n_pad, tn)

    q = np.zeros((k_pad, n_pad), dtype=np.float32)
    for i, j, k, v in entries:
        q[k, i * dim_in + j] = v
    q_flat = jnp.asarray(q).astype(q_dt)   # bf16 cast (if requested) done on device

    meta = dict(dim_out=dim_out, dim_in=dim_in, n_path=n_path,
                k_pad=k_pad, n_pad=n_pad, tn=tn, sub_tn=sub_tn, group=group)
    return q_flat, meta


# ----------------------------------------------------------------------------
# Pallas kernel: sublane-blocked broadcast-FMA over the path axis.
#   w_ref : [K_pad, 1]    VMEM f32  (zero-padded weight column)
#   q_ref : [K_pad, TN]   VMEM      (lane-dense Q tile, f32 or bf16)
#   o_ref : [1, TN]       VMEM f32  (lane-dense output tile)
# ----------------------------------------------------------------------------
def _make_fma_kernel(k_pad, group, sub_tn, n_sub):
    n_groups = k_pad // group
    unroll = 1
    for u in (4, 3, 2):
        if n_groups % u == 0:
            unroll = u
            break

    def accumulate(w_ref, q_ref, o_ref, c0):
        def body(g, acc):
            k0 = pl.multiple_of(g * group, group)
            qb = q_ref[pl.ds(k0, group), pl.ds(c0, sub_tn)].astype(jnp.float32)
            wb = w_ref[pl.ds(k0, group), :]          # (group, 1) lane-broadcast
            return acc + wb * qb                      # full-vreg VPU FMA

        acc = jax.lax.fori_loop(
            0, n_groups, body,
            jnp.zeros((group, sub_tn), jnp.float32),
            unroll=unroll)
        # Single sublane reduction (XLU) per sub-tile, lane-dense store.
        o_ref[:, pl.ds(c0, sub_tn)] = jnp.sum(acc, axis=0, keepdims=True)

    if n_sub == 1:
        def kernel(w_ref, q_ref, o_ref):
            accumulate(w_ref, q_ref, o_ref, 0)
    else:
        def kernel(w_ref, q_ref, o_ref):
            @pl.loop(0, n_sub)
            def _(s):
                accumulate(w_ref, q_ref, o_ref,
                           pl.multiple_of(s * sub_tn, sub_tn))
    return kernel


def kernel_linear_forward(q_flat, weight, meta):
    """Compute einsum('ijk,k', Q, weight) -> [dim_out, dim_in] with a Pallas kernel."""
    dim_out = meta["dim_out"]
    dim_in = meta["dim_in"]
    n_path = meta["n_path"]
    tn = meta["tn"]
    sub_tn = meta["sub_tn"]
    group = meta["group"]
    k_pad, n_pad = q_flat.shape
    n = dim_out * dim_in

    if n_path == 0 or n == 0:
        # Degenerate: no compatible (l, parity) pairs -> no paths, output is zero.
        return jnp.zeros((dim_out, dim_in), jnp.float32)

    q_bytes = jnp.dtype(q_flat.dtype).itemsize

    # Weight as a zero-padded (K_pad, 1) f32 column in VMEM (no SMEM scalar
    # reads / splats in the inner loop, no 1-D SMEM padding blowup).
    w = weight.astype(jnp.float32).reshape(n_path, 1)
    w_col = jnp.pad(w, ((0, k_pad - n_path), (0, 0)))

    grid = (n_pad // tn,)
    n_sub = tn // sub_tn

    # VMEM budget: double-buffered Q tile + weight column + output tiles + slack,
    # capped at 32 MiB (safe on v7x's 64 MiB physical VMEM; blocks are small
    # enough that v5e/v6e need no larger cap either).
    vmem_bytes = 2 * k_pad * tn * q_bytes + 4 * tn * 4 + k_pad * 4 + (2 << 20)
    vmem_bytes = int(min(max(vmem_bytes, 4 << 20), 32 << 20))

    cost = pl.CostEstimate(
        flops=2 * k_pad * n_pad,
        transcendentals=0,
        bytes_accessed=k_pad * n_pad * q_bytes + n_pad * 4 + k_pad * 4,
    )

    out_flat = pl.pallas_call(
        _make_fma_kernel(k_pad, group, sub_tn, n_sub),
        out_shape=jax.ShapeDtypeStruct((1, n_pad), jnp.float32),
        grid=grid,
        in_specs=[
            pl.BlockSpec((k_pad, 1), lambda j: (0, 0)),   # weight column (VMEM)
            pl.BlockSpec((k_pad, tn), lambda j: (0, j)),  # lane-dense Q tile
        ],
        out_specs=pl.BlockSpec((1, tn), lambda j: (0, j)),
        compiler_params=pltpu.CompilerParams(
            dimension_semantics=("parallel",),
            vmem_limit_bytes=vmem_bytes,
        ),
        cost_estimate=cost,
    )(w_col, q_flat)

    return out_flat[0, :n].reshape(dim_out, dim_in)


if __name__ == "__main__":
    # (name, Rs_in, Rs_out, Q storage dtype, rtol, atol)
    tests = [
        ("small mixed irreps / f32 Q",
         [(4, 0, 1), (2, 1, 1), (1, 2, -1)],
         [(3, 0, 1), (2, 1, 1), (2, 2, -1)],
         jnp.float32, 1e-5, 1e-6),
        ("high-l irreps, multi-tile grid / f32 Q",
         [(2, 10, 1), (2, 11, 1)],
         [(2, 10, 1), (2, 11, 1)],
         jnp.float32, 1e-5, 1e-6),
        ("small mixed irreps / bf16 Q",
         [(4, 0, 1), (2, 1, 1), (1, 2, -1)],
         [(3, 0, 1), (2, 1, 1), (2, 2, -1)],
         jnp.bfloat16, 1e-2, 1e-5),
    ]

    key = jax.random.PRNGKey(0)
    for name, Rs_in, Rs_out, q_dtype, rtol, atol in tests:
        q_flat, meta = build_linear_q_flat(Rs_in, Rs_out, q_dtype=q_dtype)
        dim_out, dim_in, n_path = meta["dim_out"], meta["dim_in"], meta["n_path"]

        key, sub = jax.random.split(key)
        weight = jax.random.normal(sub, (n_path,), dtype=jnp.float32)  # ~ torch.randn

        out = jax.block_until_ready(kernel_linear_forward(q_flat, weight, meta))

        assert out.shape == (dim_out, dim_in), name
        ref = _reference_forward(Rs_in, Rs_out, np.asarray(weight))
        np.testing.assert_allclose(np.asarray(out, np.float64), ref,
                                   rtol=rtol, atol=atol, err_msg=name)

    print("KERNEL_OK")
</pallas_src>

<mosaic_0001>
module attributes {stable_mosaic.version = 11 : i64} {
  func.func @kernel(%arg0: i32, %arg1: memref<24x1xf32, #tpu.memory_space<vmem>>, %arg2: memref<24x384xf32, #tpu.memory_space<vmem>>, %arg3: memref<1x384xf32, #tpu.memory_space<vmem>>) attributes {dimension_semantics = [#tpu.dimension_semantics<parallel>], iteration_bounds = array<i64: 1>, scalar_prefetch = 0 : i64, scratch_operands = 0 : i64, tpu.core_type = #tpu.core_type<tc>, window_params = [{pipeline_mode = #tpu.pipeline_mode<synchronous>, transform_indices = @transform_0, window_bounds = array<i64: 24, 1>}, {transform_indices = @transform_1, window_bounds = array<i64: 24, 384>}, {transform_indices = @transform_2, window_bounds = array<i64: 1, 384>}]} {
    %cst = arith.constant 0.000000e+00 : f32
    %0 = vector.broadcast %cst : f32 to vector<8x384xf32>
    %c0_i32 = arith.constant 0 : i32
    %c8_i32 = arith.constant 8 : i32
    %1 = arith.muli %c0_i32, %c8_i32 : i32
    %2 = tpu.assume_multiple %1, 8 : i32
    %3 = arith.index_cast %2 : i32 to index
    %c0 = arith.constant 0 : index
    %4 = vector.load %arg2[%3, %c0] : memref<24x384xf32, #tpu.memory_space<vmem>>, vector<8x384xf32>
    %5 = arith.index_cast %2 : i32 to index
    %c0_0 = arith.constant 0 : index
    %6 = vector.load %arg1[%5, %c0_0] : memref<24x1xf32, #tpu.memory_space<vmem>>, vector<8x1xf32>
    %7 = vector.broadcast %6 : vector<8x1xf32> to vector<8x384xf32>
    %8 = arith.mulf %7, %4 : vector<8x384xf32>
    %9 = arith.addf %0, %8 : vector<8x384xf32>
    %c1_i32 = arith.constant 1 : i32
    %c8_i32_1 = arith.constant 8 : i32
    %10 = arith.muli %c1_i32, %c8_i32_1 : i32
    %11 = tpu.assume_multiple %10, 8 : i32
    %12 = arith.index_cast %11 : i32 to index
    %c0_2 = arith.constant 0 : index
    %13 = vector.load %arg2[%12, %c0_2] : memref<24x384xf32, #tpu.memory_space<vmem>>, vector<8x384xf32>
    %14 = arith.index_cast %11 : i32 to index
    %c0_3 = arith.constant 0 : index
    %15 = vector.load %arg1[%14, %c0_3] : memref<24x1xf32, #tpu.memory_space<vmem>>, vector<8x1xf32>
    %16 = vector.broadcast %15 : vector<8x1xf32> to vector<8x384xf32>
    %17 = arith.mulf %16, %13 : vector<8x384xf32>
    %18 = arith.addf %9, %17 : vector<8x384xf32>
    %c2_i32 = arith.constant 2 : i32
    %c8_i32_4 = arith.constant 8 : i32
    %19 = arith.muli %c2_i32, %c8_i32_4 : i32
    %20 = tpu.assume_multiple %19, 8 : i32
    %21 = arith.index_cast %20 : i32 to index
    %c0_5 = arith.constant 0 : index
    %22 = vector.load %arg2[%21, %c0_5] : memref<24x384xf32, #tpu.memory_space<vmem>>, vector<8x384xf32>
    %23 = arith.index_cast %20 : i32 to index
    %c0_6 = arith.constant 0 : index
    %24 = vector.load %arg1[%23, %c0_6] : memref<24x1xf32, #tpu.memory_space<vmem>>, vector<8x1xf32>
    %25 = vector.broadcast %24 : vector<8x1xf32> to vector<8x384xf32>
    %26 = arith.mulf %25, %22 : vector<8x384xf32>
    %27 = arith.addf %18, %26 : vector<8x384xf32>
    %c3_i32 = arith.constant 3 : i32
    %cst_7 = arith.constant dense<0.000000e+00> : vector<384xf32>
    %28 = vector.multi_reduction <add>, %27, %cst_7 [0] : vector<8x384xf32> to vector<384xf32>
    %29 = vector.shape_cast %28 : vector<384xf32> to vector<1x384xf32>
    %c0_8 = arith.constant 0 : index
    %c0_9 = arith.constant 0 : index
    %30 = vector.load %arg3[%c0_8, %c0_9] : memref<1x384xf32, #tpu.memory_space<vmem>>, vector<1x384xf32>
    tpu.vector_store %arg3[%c0_8, %c0_9], %29 {strides = array<i32>} : memref<1x384xf32, #tpu.memory_space<vmem>>, vector<1x384xf32>,
    return
  }
  func.func @transform_0(%arg0: i32) -> (i32, i32) {
    %c0_i32 = arith.constant 0 : i32
    %c0_i32_0 = arith.constant 0 : i32
    %c0_i32_1 = arith.constant 0 : i32
    return %c0_i32, %c0_i32_0 : i32, i32
  }
  func.func @transform_1(%arg0: i32) -> (i32, i32) {
    %c0_i32 = arith.constant 0 : i32
    %c0_i32_0 = arith.constant 0 : i32
    return %c0_i32, %arg0 : i32, i32
  }
  func.func @transform_2(%arg0: i32) -> (i32, i32) {
    %c0_i32 = arith.constant 0 : i32
    %c0_i32_0 = arith.constant 0 : i32
    return %c0_i32, %arg0 : i32, i32
  }
}

</mosaic_0001>

<llo_original>
// kernel: tpu_custom_call.1
$region0: #{tpu_custom_call.1}
  #allocation0 [shape = 'u32[]', space=smem, size = 0x4, offset = 0x4, fixed_abs, tag = 'smem constant byte address 0x4 - core index']
  #allocation1 [shape = 'u32[144,128]{1,0:T(1,128)}', space=vmem, size = 0x12000, scoped, tag = 'internal scratch']
  %s0 = inlined_call_operand.vmem [shape: f32[24,1], index: 0, kind: input, shape index: {}]
  %s1 = inlined_call_operand.hbm [shape: f32[24,384], index: 1, kind: input, shape index: {}]
  %s2 = inlined_call_operand.hbm [shape: f32[1,384], index: 2, kind: output, shape index: {}]
  %s3 = sld [smem:[#allocation0]]
  $region22: #{tpu_custom_call.1} parent=0
    _
  %s5 = ssub.s32 1, %s3
  %s6 = scalar_select 0, %s5, %s3
  $region1: #{tpu_custom_call.1} parent=0
    #allocation2 [shape = 'u8[36864]{0}', space=vmem, size = 0x9000, scoped, tag = 'input window, operand 1, single buffered']
    #allocation3 [shape = 's32[1]{0}', space=sflag, size = 0x4, scoped, tag = 'scoped memory for tpu_custom_call.1']
    #allocation4 [shape = 's32[1]{0}', space=sflag, size = 0x4, scoped, tag = 'scoped memory for tpu_custom_call.1']
    #allocation5 [shape = 'u8[1536]{0}', space=vmem, size = 0x800, scoped, tag = 'output window, operand 0, single buffered']
    %7 = vsyncpa [#allocation3], 0
    %8 = vsyncpa [#allocation4], 0
    // Predicated region
    $region2: #{tpu_custom_call.1} parent=1 // pred_check
      _
    $region3: #{tpu_custom_call.1} parent=1 // pred_check_branch
      %10 = sbr.rel (0) target = $region5
    $region4: #{tpu_custom_call.1} parent=1 // pred_region
      _
    $region5: #{tpu_custom_call.1} parent=1 // pred_fallthru
      _
    // Predicated region
    $region6: #{tpu_custom_call.1} parent=1 // pred_check
      _
    $region7: #{tpu_custom_call.1} parent=1 // pred_check_branch
      %12 = sbr.rel (0) target = $region9
    $region8: #{tpu_custom_call.1} parent=1 // pred_region
      %s14 = ssub.s32 1152, 1152
      %15 = vsyncadd [#allocation3], %s14
      %s16 = sshll.u32 [#allocation2], 4
      %s17 = int_to_ptr.vmem [resolvable:$true] %s16
      %22 = dma.hbm_to_vmem [thread:$0]  %s1, 1152, %s17, [#allocation3], 384, 384, 24
    $region9: #{tpu_custom_call.1} parent=1 // pred_fallthru
      _
    // Predicated region
    $region10: #{tpu_custom_call.1} parent=1 // pred_check
      _
    $region11: #{tpu_custom_call.1} parent=1 // pred_check_branch
      %24 = sbr.rel (0) target = $region13
    $region12: #{tpu_custom_call.1} parent=1 // pred_region
      %25 = dma.done [#allocation3], 1152
    $region13: #{tpu_custom_call.1} parent=1 // pred_fallthru
      _
    %s26 = smul.u32 0, 3
    %s27 = smul.addr %s26, 8
    %s28 = scalar_lea.vmem [#allocation2], %s27
    %v29 = vld [vmem:[%s28] sm:$0xff]
    %v30 = vld [vmem:[%s28 + $0x8] sm:$0xff]
    %v31 = vld [vmem:[%s28 + $0x10] sm:$0xff]
    %v32 = vld [vmem:[%s0] sm:$0xff]
    %34 = vset.pattern.permute.xlu0 0
    %35 = vperm.xlu0 %34, %v32
    %v36 = vpop.permute.xlu0 %35
    %v38 = vmul.f32 %v36, %v29
    %v39 = vmul.f32 %v36, %v30
    %v40 = vmul.f32 %v36, %v31
    %v41 = vadd.f32 %v38, 0.0
    %v42 = vadd.f32 %v39, 0.0
    %v43 = vadd.f32 %v40, 0.0
    %s44 = smul.u32 1, 3
    %s45 = smul.addr %s44, 8
    %s46 = scalar_lea.vmem [#allocation2], %s45
    %v47 = vld [vmem:[%s46] sm:$0xff]
    %v48 = vld [vmem:[%s46 + $0x8] sm:$0xff]
    %v49 = vld [vmem:[%s46 + $0x10] sm:$0xff]
    %s50 = scalar_lea.vmem %s0, 8
    %v51 = vld [vmem:[%s50] sm:$0xff]
    %53 = vset.pattern.permute.xlu0 0
    %54 = vperm.xlu0 %53, %v51
    %v55 = vpop.permute.xlu0 %54
    %v57 = vmul.f32 %v55, %v47
    %v58 = vmul.f32 %v55, %v48
    %v59 = vmul.f32 %v55, %v49
    %v60 = vadd.f32 %v41, %v57
    %v61 = vadd.f32 %v42, %v58
    %v62 = vadd.f32 %v43, %v59
    %s63 = smul.u32 2, 3
    %s64 = smul.addr %s63, 8
    %s65 = scalar_lea.vmem [#allocation2], %s64
    %v66 = vld [vmem:[%s65] sm:$0xff]
    %v67 = vld [vmem:[%s65 + $0x8] sm:$0xff]
    %v68 = vld [vmem:[%s65 + $0x10] sm:$0xff]
    %s69 = scalar_lea.vmem %s0, 16
    %v70 = vld [vmem:[%s69] sm:$0xff]
    %72 = vset.pattern.permute.xlu0 0
    %73 = vperm.xlu0 %72, %v70
    %v74 = vpop.permute.xlu0 %73
    %v76 = vmul.f32 %v74, %v66
    %v77 = vmul.f32 %v74, %v67
    %v78 = vmul.f32 %v74, %v68
    %v79 = vadd.f32 %v60, %v76
    %v80 = vadd.f32 %v61, %v77
    %v81 = vadd.f32 %v62, %v78
    %v82 = vrot.slane %v79, 4
    %v83 = vadd.f32 %v79, %v82
    %v84 = vrot.slane %v83, 2
    %v85 = vadd.f32 %v83, %v84
    %v86 = vrot.slane %v85, 1
    %v87 = vadd.f32 %v85, %v86
    %v88 = vrot.slane %v80, 4
    %v89 = vadd.f32 %v80, %v88
    %v90 = vrot.slane %v89, 2
    %v91 = vadd.f32 %v89, %v90
    %v92 = vrot.slane %v91, 1
    %v93 = vadd.f32 %v91, %v92
    %v94 = vrot.slane %v81, 4
    %v95 = vadd.f32 %v81, %v94
    %v96 = vrot.slane %v95, 2
    %v97 = vadd.f32 %v95, %v96
    %v98 = vrot.slane %v97, 1
    %v99 = vadd.f32 %v97, %v98
    %v103 = vcombine.low %v87, %v93
    %v105 = vunpack.c.l.s4 1966171168
    %v106 = vunpack.c.0.s8 %v105
    %v107 = vlaneseq
    %v108 = vshrl.u32 %v107, 7
    %v109 = vsub.s32 %v106, %v108
    %v110 = vrot.slane %v103, %v109
    %v112 = vunpack.c.l.s4 1966171168
    %v113 = vunpack.c.0.s8 %v112
    %v114 = vlaneseq
    %v115 = vshrl.u32 %v114, 7
    %v116 = vsub.s32 %v113, %v115
    %v117 = vrot.slane %v99, %v116
    %v118 = vcombine.low %v110, %v117
    %v120 = vunpack.c.l.s4 1966171168
    %v121 = vunpack.c.0.s8 %v120
    %v122 = vlaneseq
    %v123 = vshrl.u32 %v122, 7
    %v124 = vsub.s32 %v121, %v123
    %v125 = vrot.slane %v118, %v124
    %v127 = vlaneseq
    %vm128 = vcmp.ge.s32.totalorder %v127, 0
    %vm129 = vcmp.lt.s32.totalorder %v127, 384
    %vm130 = vmand %vm128, %vm129
    %131 = vst.msk [vmem:[#allocation5] sm:$0x7] %vm130, %v125
    // Predicated region
    $region14: #{tpu_custom_call.1} parent=1 // pred_check
      _
    $region15: #{tpu_custom_call.1} parent=1 // pred_check_branch
      %133 = sbr.rel (0) target = $region17
    $region16: #{tpu_custom_call.1} parent=1 // pred_region
      %s135 = ssub.s32 48, 48
      %136 = vsyncadd [#allocation4], %s135
      %s138 = sshll.u32 [#allocation5], 4
      %s139 = int_to_ptr.vmem [resolvable:$true] %s138
      %141 = dma.vmem_to_hbm [thread:$0]  %s139, 48, %s2, [#allocation4]
    $region17: #{tpu_custom_call.1} parent=1 // pred_fallthru
      _
    // Predicated region
    $region18: #{tpu_custom_call.1} parent=1 // pred_check
      _
    $region19: #{tpu_custom_call.1} parent=1 // pred_check_branch
      %143 = sbr.rel (0) target = $region21
    $region20: #{tpu_custom_call.1} parent=1 // pred_region
      %144 = dma.done [#allocation4], 48
    $region21: #{tpu_custom_call.1} parent=1 // pred_fallthru
      _
    %145 = vsyncpa [#allocation3], 1
    %146 = vsyncpa [#allocation4], 1

</llo_original>
